<compile_context>
chip_gen: v7x
topology: tpu7x:2x2x1
jax: 0.10.0
libtpu: 0.0.40
codegen_flags: <defaults>
</compile_context>

<pallas_src>
import functools

import jax
import jax.numpy as jnp
from jax.experimental import pallas as pl
from jax.experimental.pallas import tpu as pltpu


def _round_up(x, m):
    return ((x + m - 1) // m) * m


def ae_kernel(x_ref, w_ref, b_ref, o_ref, *, num_layers):
    """One grid step: a (TM, DPAD) row-tile of the zero-padded input flows
    through all `num_layers` Linear(+ReLU) stages entirely in VMEM.

    Weights/biases are zero-padded into a lane-dense (L, DPAD, DPAD)/(L, DPAD)
    slab, so every matmul is (TM, DPAD) x (DPAD, DPAD) on the MXU with f32
    accumulation, the bias/ReLU epilogue is f32 VPU work, and the final store
    is an unmasked lane-dense vst. Zero padding is preserved by every stage
    (0 @ W = 0, +0 bias, ReLU(0) = 0)."""
    h = x_ref[...]                                        # (TM, DPAD) f32
    for l in range(num_layers):                           # static unroll
        y = jnp.dot(h, w_ref[l], preferred_element_type=jnp.float32)  # MXU
        y = y + b_ref[l:l + 1, :]                         # (1, DPAD) broadcast
        if l < num_layers - 1:                            # last layer: no ReLU
            y = jnp.maximum(y, 0.0)
        h = y
    o_ref[...] = h


def init_ae_params(key, input_dim, latent_dim):
    """Deterministic synthetic params. Weights stored as (in_dim, out_dim) so
    the kernel computes y = x @ W + b (equivalent to PyTorch's x @ W.T + b with
    W_torch = W.T). Biases stored as (out_dim,)."""
    dims = [
        (input_dim, input_dim // 2),
        (input_dim // 2, input_dim // 4),
        (input_dim // 4, latent_dim),
        (latent_dim, input_dim // 4),
        (input_dim // 4, input_dim // 2),
        (input_dim // 2, input_dim),
    ]
    params = []
    for (din, dout) in dims:
        key, kw, kb = jax.random.split(key, 3)
        bound = 1.0 / jnp.sqrt(din)  # mimic PyTorch Linear init range
        w = jax.random.uniform(kw, (din, dout), jnp.float32, -bound, bound)
        b = jax.random.uniform(kb, (dout,), jnp.float32, -bound, bound)
        params.append((w, b))
    return params


def pack_ae_params(params, dpad):
    """Fold the activation-free bottleneck Linear (encoder L3) into the first
    decoder Linear (L4), then zero-pad every layer into one (L, dpad, dpad)
    weight slab and one (L, dpad) bias slab (2 kernel operands instead of 12)."""
    (w1, b1), (w2, b2), (w3, b3), (w4, b4), (w5, b5), (w6, b6) = params
    hi = jax.lax.Precision.HIGHEST
    w34 = jnp.dot(w3, w4, precision=hi)
    b34 = jnp.dot(b3, w4, precision=hi) + b4
    layers = [(w1, b1), (w2, b2), (w34, b34), (w5, b5), (w6, b6)]

    num_layers = len(layers)
    W = jnp.zeros((num_layers, dpad, dpad), jnp.float32)
    B = jnp.zeros((num_layers, dpad), jnp.float32)
    for l, (w, b) in enumerate(layers):
        din, dout = w.shape
        W = W.at[l, :din, :dout].set(w.astype(jnp.float32))
        B = B.at[l, :dout].set(b.astype(jnp.float32))
    return W, B


def ae_forward(x, params, input_dim, *, tm_max=512):
    # x.view(-1, input_dim)
    x2d = x.reshape(-1, input_dim).astype(jnp.float32)
    batch = x2d.shape[0]

    dpad = _round_up(input_dim, 128)          # lane-dense feature width
    tm = min(tm_max, _round_up(batch, 8))     # row tile (512 ~ HBM roofline for big batches)
    bpad = _round_up(batch, tm)

    # Zero-pad rows to a multiple of TM and lanes to a multiple of 128.
    x_pad = jnp.pad(x2d, ((0, bpad - batch), (0, dpad - input_dim)))
    W, B = pack_ae_params(params, dpad)
    num_layers = W.shape[0]

    # Per-tile VMEM: ~2x2x(tm*dpad*4B) for x/out double buffers + weight/bias
    # slabs. At tm=512, dpad=128 that's ~1.4 MiB — well inside even v7x's
    # 32 MiB scoped default, so no vmem_limit_bytes override needed.
    grid = (bpad // tm,)
    kernel = functools.partial(ae_kernel, num_layers=num_layers)

    out = pl.pallas_call(
        kernel,
        out_shape=jax.ShapeDtypeStruct((bpad, dpad), jnp.float32),
        grid=grid,
        in_specs=[
            pl.BlockSpec((tm, dpad), lambda i: (i, 0)),                    # x: tiled over batch
            pl.BlockSpec((num_layers, dpad, dpad), lambda i: (0, 0, 0)),   # weights: resident
            pl.BlockSpec((num_layers, dpad), lambda i: (0, 0)),            # biases: resident
        ],
        out_specs=pl.BlockSpec((tm, dpad), lambda i: (i, 0)),
        compiler_params=pltpu.CompilerParams(
            dimension_semantics=("parallel",),   # batch tiles shard across TCs on v7x
        ),
    )(x_pad, W, B)

    return out[:batch, :input_dim]


def ae_reference(x, params, input_dim):
    """Pure-JAX layer-by-layer reference matching the PyTorch module."""
    h = x.reshape(-1, input_dim).astype(jnp.float32)
    for i, (w, b) in enumerate(params):
        h = h @ w + b
        if i not in (2, 5):  # no ReLU after last encoder / last decoder layer
            h = jnp.maximum(h, 0.0)
    return h


if __name__ == "__main__":
    input_dim = 64
    latent_dim = 8
    batch = 8

    key = jax.random.PRNGKey(0)
    kx, kp = jax.random.split(key)
    # Small input; flattened to (batch, input_dim) just like x.view(-1, input_dim)
    x = jax.random.normal(kx, (batch, input_dim), jnp.float32)
    params = init_ae_params(kp, input_dim, latent_dim)

    y = jax.block_until_ready(ae_forward(x, params, input_dim))
    y_ref = ae_reference(x, params, input_dim)

    assert y.shape == (batch, input_dim)
    # The W3@W4 / b3@W4+b4 folding reassociates fp ops vs. the layer-by-layer
    # reference; the difference is a few ulps at these magnitudes.
    assert jnp.allclose(y, y_ref, atol=5e-5, rtol=5e-5), float(jnp.max(jnp.abs(y - y_ref)))

    print("KERNEL_OK")
</pallas_src>

<mosaic_0001>
module attributes {stable_mosaic.version = 11 : i64} {
  func.func @ae_kernel(%arg0: i32, %arg1: memref<8x128xf32, #tpu.memory_space<vmem>>, %arg2: memref<5x128x128xf32, #tpu.memory_space<vmem>>, %arg3: memref<5x128xf32, #tpu.memory_space<vmem>>, %arg4: memref<8x128xf32, #tpu.memory_space<vmem>>) attributes {dimension_semantics = [#tpu.dimension_semantics<parallel>], iteration_bounds = array<i64: 1>, scalar_prefetch = 0 : i64, scratch_operands = 0 : i64, tpu.core_type = #tpu.core_type<tc>, window_params = [{transform_indices = @transform_0, window_bounds = array<i64: 8, 128>}, {pipeline_mode = #tpu.pipeline_mode<synchronous>, transform_indices = @transform_1, window_bounds = array<i64: 5, 128, 128>}, {pipeline_mode = #tpu.pipeline_mode<synchronous>, transform_indices = @transform_2, window_bounds = array<i64: 5, 128>}, {transform_indices = @transform_3, window_bounds = array<i64: 8, 128>}]} {
    %c0 = arith.constant 0 : index
    %c0_0 = arith.constant 0 : index
    %0 = vector.load %arg1[%c0, %c0_0] : memref<8x128xf32, #tpu.memory_space<vmem>>, vector<8x128xf32>
    %c0_1 = arith.constant 0 : index
    %c0_2 = arith.constant 0 : index
    %c0_3 = arith.constant 0 : index
    %1 = vector.load %arg2[%c0_1, %c0_2, %c0_3] : memref<5x128x128xf32, #tpu.memory_space<vmem>>, vector<1x128x128xf32>
    %2 = vector.shape_cast %1 : vector<1x128x128xf32> to vector<128x128xf32>
    %cst = arith.constant dense<0.000000e+00> : vector<8x128xf32>
    %3 = tpu.matmul %0, %2, %cst {dimension_numbers = #tpu.dot_dimension_numbers<[1], [0], [0], [1], [0, 0, 1, 1], [], []>} : vector<8x128xf32>, vector<128x128xf32>, vector<8x128xf32> -> vector<8x128xf32>
    %c0_4 = arith.constant 0 : index
    %c0_5 = arith.constant 0 : index
    %4 = vector.load %arg3[%c0_4, %c0_5] : memref<5x128xf32, #tpu.memory_space<vmem>>, vector<1x128xf32>
    %5 = vector.broadcast %4 : vector<1x128xf32> to vector<8x128xf32>
    %6 = arith.addf %3, %5 : vector<8x128xf32>
    %cst_6 = arith.constant 0.000000e+00 : f32
    %7 = vector.broadcast %cst_6 : f32 to vector<8x128xf32>
    %8 = arith.maximumf %6, %7 : vector<8x128xf32>
    %c1 = arith.constant 1 : index
    %c0_7 = arith.constant 0 : index
    %c0_8 = arith.constant 0 : index
    %9 = vector.load %arg2[%c1, %c0_7, %c0_8] : memref<5x128x128xf32, #tpu.memory_space<vmem>>, vector<1x128x128xf32>
    %10 = vector.shape_cast %9 : vector<1x128x128xf32> to vector<128x128xf32>
    %cst_9 = arith.constant dense<0.000000e+00> : vector<8x128xf32>
    %11 = tpu.matmul %8, %10, %cst_9 {dimension_numbers = #tpu.dot_dimension_numbers<[1], [0], [0], [1], [0, 0, 1, 1], [], []>} : vector<8x128xf32>, vector<128x128xf32>, vector<8x128xf32> -> vector<8x128xf32>
    %c1_10 = arith.constant 1 : index
    %c0_11 = arith.constant 0 : index
    %12 = vector.load %arg3[%c1_10, %c0_11] : memref<5x128xf32, #tpu.memory_space<vmem>>, vector<1x128xf32>
    %13 = vector.broadcast %12 : vector<1x128xf32> to vector<8x128xf32>
    %14 = arith.addf %11, %13 : vector<8x128xf32>
    %cst_12 = arith.constant 0.000000e+00 : f32
    %15 = vector.broadcast %cst_12 : f32 to vector<8x128xf32>
    %16 = arith.maximumf %14, %15 : vector<8x128xf32>
    %c2 = arith.constant 2 : index
    %c0_13 = arith.constant 0 : index
    %c0_14 = arith.constant 0 : index
    %17 = vector.load %arg2[%c2, %c0_13, %c0_14] : memref<5x128x128xf32, #tpu.memory_space<vmem>>, vector<1x128x128xf32>
    %18 = vector.shape_cast %17 : vector<1x128x128xf32> to vector<128x128xf32>
    %cst_15 = arith.constant dense<0.000000e+00> : vector<8x128xf32>
    %19 = tpu.matmul %16, %18, %cst_15 {dimension_numbers = #tpu.dot_dimension_numbers<[1], [0], [0], [1], [0, 0, 1, 1], [], []>} : vector<8x128xf32>, vector<128x128xf32>, vector<8x128xf32> -> vector<8x128xf32>
    %c2_16 = arith.constant 2 : index
    %c0_17 = arith.constant 0 : index
    %20 = vector.load %arg3[%c2_16, %c0_17] : memref<5x128xf32, #tpu.memory_space<vmem>>, vector<1x128xf32>
    %21 = vector.broadcast %20 : vector<1x128xf32> to vector<8x128xf32>
    %22 = arith.addf %19, %21 : vector<8x128xf32>
    %cst_18 = arith.constant 0.000000e+00 : f32
    %23 = vector.broadcast %cst_18 : f32 to vector<8x128xf32>
    %24 = arith.maximumf %22, %23 : vector<8x128xf32>
    %c3 = arith.constant 3 : index
    %c0_19 = arith.constant 0 : index
    %c0_20 = arith.constant 0 : index
    %25 = vector.load %arg2[%c3, %c0_19, %c0_20] : memref<5x128x128xf32, #tpu.memory_space<vmem>>, vector<1x128x128xf32>
    %26 = vector.shape_cast %25 : vector<1x128x128xf32> to vector<128x128xf32>
    %cst_21 = arith.constant dense<0.000000e+00> : vector<8x128xf32>
    %27 = tpu.matmul %24, %26, %cst_21 {dimension_numbers = #tpu.dot_dimension_numbers<[1], [0], [0], [1], [0, 0, 1, 1], [], []>} : vector<8x128xf32>, vector<128x128xf32>, vector<8x128xf32> -> vector<8x128xf32>
    %c3_22 = arith.constant 3 : index
    %c0_23 = arith.constant 0 : index
    %28 = vector.load %arg3[%c3_22, %c0_23] : memref<5x128xf32, #tpu.memory_space<vmem>>, vector<1x128xf32>
    %29 = vector.broadcast %28 : vector<1x128xf32> to vector<8x128xf32>
    %30 = arith.addf %27, %29 : vector<8x128xf32>
    %cst_24 = arith.constant 0.000000e+00 : f32
    %31 = vector.broadcast %cst_24 : f32 to vector<8x128xf32>
    %32 = arith.maximumf %30, %31 : vector<8x128xf32>
    %c4 = arith.constant 4 : index
    %c0_25 = arith.constant 0 : index
    %c0_26 = arith.constant 0 : index
    %33 = vector.load %arg2[%c4, %c0_25, %c0_26] : memref<5x128x128xf32, #tpu.memory_space<vmem>>, vector<1x128x128xf32>
    %34 = vector.shape_cast %33 : vector<1x128x128xf32> to vector<128x128xf32>
    %cst_27 = arith.constant dense<0.000000e+00> : vector<8x128xf32>
    %35 = tpu.matmul %32, %34, %cst_27 {dimension_numbers = #tpu.dot_dimension_numbers<[1], [0], [0], [1], [0, 0, 1, 1], [], []>} : vector<8x128xf32>, vector<128x128xf32>, vector<8x128xf32> -> vector<8x128xf32>
    %c4_28 = arith.constant 4 : index
    %c0_29 = arith.constant 0 : index
    %36 = vector.load %arg3[%c4_28, %c0_29] : memref<5x128xf32, #tpu.memory_space<vmem>>, vector<1x128xf32>
    %37 = vector.broadcast %36 : vector<1x128xf32> to vector<8x128xf32>
    %38 = arith.addf %35, %37 : vector<8x128xf32>
    %c0_30 = arith.constant 0 : index
    %c0_31 = arith.constant 0 : index
    %39 = vector.load %arg4[%c0_30, %c0_31] : memref<8x128xf32, #tpu.memory_space<vmem>>, vector<8x128xf32>
    tpu.vector_store %arg4[%c0_30, %c0_31], %38 {strides = array<i32>} : memref<8x128xf32, #tpu.memory_space<vmem>>, vector<8x128xf32>,
    return
  }
  func.func @transform_0(%arg0: i32) -> (i32, i32) {
    %c0_i32 = arith.constant 0 : i32
    %c0_i32_0 = arith.constant 0 : i32
    return %arg0, %c0_i32 : i32, i32
  }
  func.func @transform_1(%arg0: i32) -> (i32, i32, i32) {
    %c0_i32 = arith.constant 0 : i32
    %c0_i32_0 = arith.constant 0 : i32
    %c0_i32_1 = arith.constant 0 : i32
    %c0_i32_2 = arith.constant 0 : i32
    return %c0_i32, %c0_i32_0, %c0_i32_1 : i32, i32, i32
  }
  func.func @transform_2(%arg0: i32) -> (i32, i32) {
    %c0_i32 = arith.constant 0 : i32
    %c0_i32_0 = arith.constant 0 : i32
    %c0_i32_1 = arith.constant 0 : i32
    return %c0_i32, %c0_i32_0 : i32, i32
  }
  func.func @transform_3(%arg0: i32) -> (i32, i32) {
    %c0_i32 = arith.constant 0 : i32
    %c0_i32_0 = arith.constant 0 : i32
    return %arg0, %c0_i32 : i32, i32
  }
}

</mosaic_0001>

<llo_original>
// kernel: tpu_custom_call.1
$region0: #{tpu_custom_call.1}
  #allocation0 [shape = 'u32[]', space=smem, size = 0x4, offset = 0x4, fixed_abs, tag = 'smem constant byte address 0x4 - core index']
  #allocation1 [shape = 'u32[144,128]{1,0:T(1,128)}', space=vmem, size = 0x12000, scoped, tag = 'internal scratch']
  %s0 = inlined_call_operand.hbm [shape: f32[8,128], index: 0, kind: input, shape index: {}]
  %s1 = inlined_call_operand.hbm [shape: f32[5,128,128], index: 1, kind: input, shape index: {}]
  %s2 = inlined_call_operand.hbm [shape: f32[5,128], index: 2, kind: input, shape index: {}]
  %s3 = inlined_call_operand.hbm [shape: f32[8,128], index: 3, kind: output, shape index: {}]
  %s4 = sld [smem:[#allocation0]]
  $region34: #{tpu_custom_call.1} parent=0
    _
  %s6 = ssub.s32 1, %s4
  %s7 = scalar_select 0, %s6, %s4
  $region1: #{tpu_custom_call.1} parent=0
    #allocation2 [shape = 'u8[4096]{0}', space=vmem, size = 0x1000, scoped, tag = 'input window, operand 0, single buffered']
    #allocation3 [shape = 's32[1]{0}', space=sflag, size = 0x4, scoped, tag = 'scoped memory for tpu_custom_call.1']
    #allocation4 [shape = 's32[1]{0}', space=sflag, size = 0x4, scoped, tag = 'scoped memory for tpu_custom_call.1']
    #allocation5 [shape = 'u8[327680]{0}', space=vmem, size = 0x50000, scoped, tag = 'input window, operand 1, single buffered']
    #allocation6 [shape = 's32[1]{0}', space=sflag, size = 0x4, scoped, tag = 'scoped memory for tpu_custom_call.1']
    #allocation7 [shape = 'u8[4096]{0}', space=vmem, size = 0x1000, scoped, tag = 'input window, operand 2, single buffered']
    #allocation8 [shape = 'u8[4096]{0}', space=vmem, size = 0x1000, scoped, tag = 'output window, operand 0, single buffered']
    %8 = vsyncpa [#allocation3], 0
    %9 = vsyncpa [#allocation6], 0
    %10 = vsyncpa [#allocation4], 0
    // Predicated region
    $region2: #{tpu_custom_call.1} parent=1 // pred_check
      _
    $region3: #{tpu_custom_call.1} parent=1 // pred_check_branch
      %12 = sbr.rel (0) target = $region5
    $region4: #{tpu_custom_call.1} parent=1 // pred_region
      %s14 = ssub.s32 128, 128
      %15 = vsyncadd [#allocation3], %s14
      %s17 = sshll.u32 [#allocation2], 4
      %s18 = int_to_ptr.vmem [resolvable:$true] %s17
      %20 = dma.hbm_to_vmem [thread:$0]  %s0, 128, %s18, [#allocation3]
    $region5: #{tpu_custom_call.1} parent=1 // pred_fallthru
      _
    // Predicated region
    $region6: #{tpu_custom_call.1} parent=1 // pred_check
      _
    $region7: #{tpu_custom_call.1} parent=1 // pred_check_branch
      %22 = sbr.rel (0) target = $region9
    $region8: #{tpu_custom_call.1} parent=1 // pred_region
      %s24 = ssub.s32 10240, 10240
      %25 = vsyncadd [#allocation6], %s24
      %s26 = sshll.u32 [#allocation5], 4
      %s27 = int_to_ptr.vmem [resolvable:$true] %s26
      %32 = dma.hbm_to_vmem [thread:$0]  %s1, 10240, %s27, [#allocation6], 128, 128, 8
    $region9: #{tpu_custom_call.1} parent=1 // pred_fallthru
      _
    // Predicated region
    $region10: #{tpu_custom_call.1} parent=1 // pred_check
      _
    $region11: #{tpu_custom_call.1} parent=1 // pred_check_branch
      %34 = sbr.rel (0) target = $region13
    $region12: #{tpu_custom_call.1} parent=1 // pred_region
      %s36 = ssub.s32 128, 128
      %37 = vsyncadd [#allocation6], %s36
      %s39 = sshll.u32 [#allocation7], 4
      %s40 = int_to_ptr.vmem [resolvable:$true] %s39
      %42 = dma.hbm_to_vmem [thread:$0]  %s2, 128, %s40, [#allocation6]
    $region13: #{tpu_custom_call.1} parent=1 // pred_fallthru
      _
    // Predicated region
    $region14: #{tpu_custom_call.1} parent=1 // pred_check
      _
    $region15: #{tpu_custom_call.1} parent=1 // pred_check_branch
      %44 = sbr.rel (0) target = $region17
    $region16: #{tpu_custom_call.1} parent=1 // pred_region
      %45 = dma.done [#allocation3], 128
    $region17: #{tpu_custom_call.1} parent=1 // pred_fallthru
      _
    // Predicated region
    $region18: #{tpu_custom_call.1} parent=1 // pred_check
      _
    $region19: #{tpu_custom_call.1} parent=1 // pred_check_branch
      %47 = sbr.rel (0) target = $region21
    $region20: #{tpu_custom_call.1} parent=1 // pred_region
      %48 = dma.done [#allocation6], 10240
    $region21: #{tpu_custom_call.1} parent=1 // pred_fallthru
      _
    // Predicated region
    $region22: #{tpu_custom_call.1} parent=1 // pred_check
      _
    $region23: #{tpu_custom_call.1} parent=1 // pred_check_branch
      %50 = sbr.rel (0) target = $region25
    $region24: #{tpu_custom_call.1} parent=1 // pred_region
      %51 = dma.done [#allocation6], 128
    $region25: #{tpu_custom_call.1} parent=1 // pred_fallthru
      _
    %v52 = vld [vmem:[#allocation2] sm:$0xff]
    %v53 = vld [vmem:[#allocation5] sm:$0xff]
    %v54 = vld [vmem:[#allocation5 + $0x8] sm:$0xff]
    %v55 = vld [vmem:[#allocation5 + $0x10] sm:$0xff]
    %v56 = vld [vmem:[#allocation5 + $0x18] sm:$0xff]
    %v57 = vld [vmem:[#allocation5 + $0x20] sm:$0xff]
    %v58 = vld [vmem:[#allocation5 + $0x28] sm:$0xff]
    %v59 = vld [vmem:[#allocation5 + $0x30] sm:$0xff]
    %v60 = vld [vmem:[#allocation5 + $0x38] sm:$0xff]
    %v61 = vld [vmem:[#allocation5 + $0x40] sm:$0xff]
    %v62 = vld [vmem:[#allocation5 + $0x48] sm:$0xff]
    %v63 = vld [vmem:[#allocation5 + $0x50] sm:$0xff]
    %v64 = vld [vmem:[#allocation5 + $0x58] sm:$0xff]
    %v65 = vld [vmem:[#allocation5 + $0x60] sm:$0xff]
    %v66 = vld [vmem:[#allocation5 + $0x68] sm:$0xff]
    %v67 = vld [vmem:[#allocation5 + $0x70] sm:$0xff]
    %v68 = vld [vmem:[#allocation5 + $0x78] sm:$0xff]
    %v69 = vld [vmem:[#allocation7] sm:$0x1]
    %v70 = vlaneseq
    %v71 = vshrl.u32 %v70, 7
    %v72 = vsub.s32 0, %v71
    %v73 = vrot.slane %v69, %v72
    %74 = vmatprep.subr.mxu0 0.0
    %75 = vmatpush1.msra.mxu0 %v53
    %76 = vmatprep.subr.mxu0 0.0
    %77 = vmatpush1.msra.mxu0 %v54
    %78 = vmatprep.subr.mxu0 0.0
    %79 = vmatpush1.msra.mxu0 %v55
    %80 = vmatprep.subr.mxu0 0.0
    %81 = vmatpush1.msra.mxu0 %v56
    %82 = vmatprep.subr.mxu0 0.0
    %83 = vmatpush1.msra.mxu0 %v57
    %84 = vmatprep.subr.mxu0 0.0
    %85 = vmatpush1.msra.mxu0 %v58
    %86 = vmatprep.subr.mxu0 0.0
    %87 = vmatpush1.msra.mxu0 %v59
    %88 = vmatprep.subr.mxu0 0.0
    %89 = vmatpush1.msra.mxu0 %v60
    %90 = vmatprep.subr.mxu0 0.0
    %91 = vmatpush1.msra.mxu0 %v61
    %92 = vmatprep.subr.mxu0 0.0
    %93 = vmatpush1.msra.mxu0 %v62
    %94 = vmatprep.subr.mxu0 0.0
    %95 = vmatpush1.msra.mxu0 %v63
    %96 = vmatprep.subr.mxu0 0.0
    %97 = vmatpush1.msra.mxu0 %v64
    %98 = vmatprep.subr.mxu0 0.0
    %99 = vmatpush1.msra.mxu0 %v65
    %100 = vmatprep.subr.mxu0 0.0
    %101 = vmatpush1.msra.mxu0 %v66
    %102 = vmatprep.subr.mxu0 0.0
    %103 = vmatpush1.msra.mxu0 %v67
    %104 = vmatprep.subr.mxu0 0.0
    %105 = vmatpush1.msra.mxu0 %v68
    %106 = vmatprep.subr.mxu0 0.0
    %107 = vmatpush1.msra.mxu0 0.0
    %108 = vmatprep.subr.mxu0 0.0
    %109 = vmatpush1.msra.mxu0 0.0
    %110 = vmatprep.subr.mxu0 0.0
    %111 = vmatpush1.msra.mxu0 0.0
    %112 = vmatprep.subr.mxu0 0.0
    %113 = vmatpush1.msra.mxu0 0.0
    %114 = vmatprep.subr.mxu0 0.0
    %115 = vmatpush1.msra.mxu0 0.0
    %116 = vmatprep.subr.mxu0 0.0
    %117 = vmatpush1.msra.mxu0 0.0
    %118 = vmatprep.subr.mxu0 0.0
    %119 = vmatpush1.msra.mxu0 0.0
    %120 = vmatprep.subr.mxu0 0.0
    %121 = vmatpush1.msra.mxu0 0.0
    %122 = vmatprep.subr.mxu0 0.0
    %123 = vmatpush1.msra.mxu0 0.0
    %124 = vmatprep.subr.mxu0 0.0
    %125 = vmatpush1.msra.mxu0 0.0
    %126 = vmatprep.subr.mxu0 0.0
    %127 = vmatpush1.msra.mxu0 0.0
    %128 = vmatprep.subr.mxu0 0.0
    %129 = vmatpush1.msra.mxu0 0.0
    %130 = vmatprep.subr.mxu0 0.0
    %131 = vmatpush1.msra.mxu0 0.0
    %132 = vmatprep.subr.mxu0 0.0
    %133 = vmatpush1.msra.mxu0 0.0
    %134 = vmatprep.subr.mxu0 0.0
    %135 = vmatpush1.msra.mxu0 0.0
    %136 = vmatprep.subr.mxu0 0.0
    %137 = vmatpush1.msra.mxu0 0.0
    %138 = vmatprep.mubr.f32.mxu0 0.0
    %139 = vmatmul.mubr.f32.gmra.mrb[0].mxu0 %v52
    %v140 = vpop.f32.mrb[0].mxu0
    %v141 = vadd.f32 %v73, %v140
    %v142 = vpop.f32.mrb[0].mxu0
    %143 = vdwg.mxu0
    %v144 = vmax.f32 %v141, 0.0
    %s145 = scalar_lea.vmem [#allocation5], 128
    %v146 = vld [vmem:[%s145] sm:$0xff]
    %v147 = vld [vmem:[%s145 + $0x8] sm:$0xff]
    %v148 = vld [vmem:[%s145 + $0x10] sm:$0xff]
    %v149 = vld [vmem:[%s145 + $0x18] sm:$0xff]
    %v150 = vld [vmem:[%s145 + $0x20] sm:$0xff]
    %v151 = vld [vmem:[%s145 + $0x28] sm:$0xff]
    %v152 = vld [vmem:[%s145 + $0x30] sm:$0xff]
    %v153 = vld [vmem:[%s145 + $0x38] sm:$0xff]
    %v154 = vld [vmem:[%s145 + $0x40] sm:$0xff]
    %v155 = vld [vmem:[%s145 + $0x48] sm:$0xff]
    %v156 = vld [vmem:[%s145 + $0x50] sm:$0xff]
    %v157 = vld [vmem:[%s145 + $0x58] sm:$0xff]
    %v158 = vld [vmem:[%s145 + $0x60] sm:$0xff]
    %v159 = vld [vmem:[%s145 + $0x68] sm:$0xff]
    %v160 = vld [vmem:[%s145 + $0x70] sm:$0xff]
    %v161 = vld [vmem:[%s145 + $0x78] sm:$0xff]
    %v162 = vld [vmem:[#allocation7 + $0x1] sm:$0x1]
    %v163 = vlaneseq
    %v164 = vshrl.u32 %v163, 7
    %v165 = vsub.s32 0, %v164
    %v166 = vrot.slane %v162, %v165
    %167 = vmatprep.subr.mxu0 0.0
    %168 = vmatpush1.msra.mxu0 %v146
    %169 = vmatprep.subr.mxu0 0.0
    %170 = vmatpush1.msra.mxu0 %v147
    %171 = vmatprep.subr.mxu0 0.0
    %172 = vmatpush1.msra.mxu0 %v148
    %173 = vmatprep.subr.mxu0 0.0
    %174 = vmatpush1.msra.mxu0 %v149
    %175 = vmatprep.subr.mxu0 0.0
    %176 = vmatpush1.msra.mxu0 %v150
    %177 = vmatprep.subr.mxu0 0.0
    %178 = vmatpush1.msra.mxu0 %v151
    %179 = vmatprep.subr.mxu0 0.0
    %180 = vmatpush1.msra.mxu0 %v152
    %181 = vmatprep.subr.mxu0 0.0
    %182 = vmatpush1.msra.mxu0 %v153
    %183 = vmatprep.subr.mxu0 0.0
    %184 = vmatpush1.msra.mxu0 %v154
    %185 = vmatprep.subr.mxu0 0.0
    %186 = vmatpush1.msra.mxu0 %v155
    %187 = vmatprep.subr.mxu0 0.0
    %188 = vmatpush1.msra.mxu0 %v156
    %189 = vmatprep.subr.mxu0 0.0
    %190 = vmatpush1.msra.mxu0 %v157
    %191 = vmatprep.subr.mxu0 0.0
    %192 = vmatpush1.msra.mxu0 %v158
    %193 = vmatprep.subr.mxu0 0.0
    %194 = vmatpush1.msra.mxu0 %v159
    %195 = vmatprep.subr.mxu0 0.0
    %196 = vmatpush1.msra.mxu0 %v160
    %197 = vmatprep.subr.mxu0 0.0
    %198 = vmatpush1.msra.mxu0 %v161
    %199 = vmatprep.subr.mxu0 0.0
    %200 = vmatpush1.msra.mxu0 0.0
    %201 = vmatprep.subr.mxu0 0.0
    %202 = vmatpush1.msra.mxu0 0.0
    %203 = vmatprep.subr.mxu0 0.0
    %204 = vmatpush1.msra.mxu0 0.0
    %205 = vmatprep.subr.mxu0 0.0
    %206 = vmatpush1.msra.mxu0 0.0
    %207 = vmatprep.subr.mxu0 0.0
    %208 = vmatpush1.msra.mxu0 0.0
    %209 = vmatprep.subr.mxu0 0.0
    %210 = vmatpush1.msra.mxu0 0.0
    %211 = vmatprep.subr.mxu0 0.0
    %212 = vmatpush1.msra.mxu0 0.0
    %213 = vmatprep.subr.mxu0 0.0
    %214 = vmatpush1.msra.mxu0 0.0
    %215 = vmatprep.subr.mxu0 0.0
    %216 = vmatpush1.msra.mxu0 0.0
    %217 = vmatprep.subr.mxu0 0.0
    %218 = vmatpush1.msra.mxu0 0.0
    %219 = vmatprep.subr.mxu0 0.0
    %220 = vmatpush1.msra.mxu0 0.0
    %221 = vmatprep.subr.mxu0 0.0
    %222 = vmatpush1.msra.mxu0 0.0
    %223 = vmatprep.subr.mxu0 0.0
    %224 = vmatpush1.msra.mxu0 0.0
    %225 = vmatprep.subr.mxu0 0.0
    %226 = vmatpush1.msra.mxu0 0.0
    %227 = vmatprep.subr.mxu0 0.0
    %228 = vmatpush1.msra.mxu0 0.0
    %229 = vmatprep.subr.mxu0 0.0
    %230 = vmatpush1.msra.mxu0 0.0
    %231 = vmatprep.mubr.f32.mxu0 0.0
    %232 = vmatmul.mubr.f32.gmra.mrb[0].mxu0 %v144
    %v233 = vpop.f32.mrb[0].mxu0
    %v234 = vadd.f32 %v166, %v233
    %v235 = vpop.f32.mrb[0].mxu0
    %236 = vdwg.mxu0
    %v237 = vmax.f32 %v234, 0.0
    %s238 = scalar_lea.vmem [#allocation5], 256
    %v239 = vld [vmem:[%s238] sm:$0xff]
    %v240 = vld [vmem:[%s238 + $0x8] sm:$0xff]
    %v241 = vld [vmem:[%s238 + $0x10] sm:$0xff]
    %v242 = vld [vmem:[%s238 + $0x18] sm:$0xff]
    %v243 = vld [vmem:[%s238 + $0x20] sm:$0xff]
    %v244 = vld [vmem:[%s238 + $0x28] sm:$0xff]
    %v245 = vld [vmem:[%s238 + $0x30] sm:$0xff]
    %v246 = vld [vmem:[%s238 + $0x38] sm:$0xff]
    %v247 = vld [vmem:[%s238 + $0x40] sm:$0xff]
    %v248 = vld [vmem:[%s238 + $0x48] sm:$0xff]
    %v249 = vld [vmem:[%s238 + $0x50] sm:$0xff]
    %v250 = vld [vmem:[%s238 + $0x58] sm:$0xff]
    %v251 = vld [vmem:[%s238 + $0x60] sm:$0xff]
    %v252 = vld [vmem:[%s238 + $0x68] sm:$0xff]
    %v253 = vld [vmem:[%s238 + $0x70] sm:$0xff]
    %v254 = vld [vmem:[%s238 + $0x78] sm:$0xff]
    %v255 = vld [vmem:[#allocation7 + $0x2] sm:$0x1]
    %v256 = vlaneseq
    %v257 = vshrl.u32 %v256, 7
    %v258 = vsub.s32 0, %v257
    %v259 = vrot.slane %v255, %v258
    %260 = vmatprep.subr.mxu0 0.0
    %261 = vmatpush1.msra.mxu0 %v239
    %262 = vmatprep.subr.mxu0 0.0
    %263 = vmatpush1.msra.mxu0 %v240
    %264 = vmatprep.subr.mxu0 0.0
    %265 = vmatpush1.msra.mxu0 %v241
    %266 = vmatprep.subr.mxu0 0.0
    %267 = vmatpush1.msra.mxu0 %v242
    %268 = vmatprep.subr.mxu0 0.0
    %269 = vmatpush1.msra.mxu0 %v243
    %270 = vmatprep.subr.mxu0 0.0
    %271 = vmatpush1.msra.mxu0 %v244
    %272 = vmatprep.subr.mxu0 0.0
    %273 = vmatpush1.msra.mxu0 %v245
    %274 = vmatprep.subr.mxu0 0.0
    %275 = vmatpush1.msra.mxu0 %v246
    %276 = vmatprep.subr.mxu0 0.0
    %277 = vmatpush1.msra.mxu0 %v247
    %278 = vmatprep.subr.mxu0 0.0
    %279 = vmatpush1.msra.mxu0 %v248
    %280 = vmatprep.subr.mxu0 0.0
    %281 = vmatpush1.msra.mxu0 %v249
    %282 = vmatprep.subr.mxu0 0.0
    %283 = vmatpush1.msra.mxu0 %v250
    %284 = vmatprep.subr.mxu0 0.0
    %285 = vmatpush1.msra.mxu0 %v251
    %286 = vmatprep.subr.mxu0 0.0
    %287 = vmatpush1.msra.mxu0 %v252
    %288 = vmatprep.subr.mxu0 0.0
    %289 = vmatpush1.msra.mxu0 %v253
    %290 = vmatprep.subr.mxu0 0.0
    %291 = vmatpush1.msra.mxu0 %v254
    %292 = vmatprep.subr.mxu0 0.0
    %293 = vmatpush1.msra.mxu0 0.0
    %294 = vmatprep.subr.mxu0 0.0
    %295 = vmatpush1.msra.mxu0 0.0
    %296 = vmatprep.subr.mxu0 0.0
    %297 = vmatpush1.msra.mxu0 0.0
    %298 = vmatprep.subr.mxu0 0.0
    %299 = vmatpush1.msra.mxu0 0.0
    %300 = vmatprep.subr.mxu0 0.0
    %301 = vmatpush1.msra.mxu0 0.0
    %302 = vmatprep.subr.mxu0 0.0
    %303 = vmatpush1.msra.mxu0 0.0
    %304 = vmatprep.subr.mxu0 0.0
    %305 = vmatpush1.msra.mxu0 0.0
    %306 = vmatprep.subr.mxu0 0.0
    %307 = vmatpush1.msra.mxu0 0.0
    %308 = vmatprep.subr.mxu0 0.0
    %309 = vmatpush1.msra.mxu0 0.0
    %310 = vmatprep.subr.mxu0 0.0
    %311 = vmatpush1.msra.mxu0 0.0
    %312 = vmatprep.subr.mxu0 0.0
    %313 = vmatpush1.msra.mxu0 0.0
    %314 = vmatprep.subr.mxu0 0.0
    %315 = vmatpush1.msra.mxu0 0.0
    %316 = vmatprep.subr.mxu0 0.0
    %317 = vmatpush1.msra.mxu0 0.0
    %318 = vmatprep.subr.mxu0 0.0
    %319 = vmatpush1.msra.mxu0 0.0
    %320 = vmatprep.subr.mxu0 0.0
    %321 = vmatpush1.msra.mxu0 0.0
    %322 = vmatprep.subr.mxu0 0.0
    %323 = vmatpush1.msra.mxu0 0.0
    %324 = vmatprep.mubr.f32.mxu0 0.0
    %325 = vmatmul.mubr.f32.gmra.mrb[0].mxu0 %v237
    %v326 = vpop.f32.mrb[0].mxu0
    %v327 = vadd.f32 %v259, %v326
    %v328 = vpop.f32.mrb[0].mxu0
    %329 = vdwg.mxu0
    %v330 = vmax.f32 %v327, 0.0
    %s331 = scalar_lea.vmem [#allocation5], 384
    %v332 = vld [vmem:[%s331] sm:$0xff]
    %v333 = vld [vmem:[%s331 + $0x8] sm:$0xff]
    %v334 = vld [vmem:[%s331 + $0x10] sm:$0xff]
    %v335 = vld [vmem:[%s331 + $0x18] sm:$0xff]
    %v336 = vld [vmem:[%s331 + $0x20] sm:$0xff]
    %v337 = vld [vmem:[%s331 + $0x28] sm:$0xff]
    %v338 = vld [vmem:[%s331 + $0x30] sm:$0xff]
    %v339 = vld [vmem:[%s331 + $0x38] sm:$0xff]
    %v340 = vld [vmem:[%s331 + $0x40] sm:$0xff]
    %v341 = vld [vmem:[%s331 + $0x48] sm:$0xff]
    %v342 = vld [vmem:[%s331 + $0x50] sm:$0xff]
    %v343 = vld [vmem:[%s331 + $0x58] sm:$0xff]
    %v344 = vld [vmem:[%s331 + $0x60] sm:$0xff]
    %v345 = vld [vmem:[%s331 + $0x68] sm:$0xff]
    %v346 = vld [vmem:[%s331 + $0x70] sm:$0xff]
    %v347 = vld [vmem:[%s331 + $0x78] sm:$0xff]
    %v348 = vld [vmem:[#allocation7 + $0x3] sm:$0x1]
    %v349 = vlaneseq
    %v350 = vshrl.u32 %v349, 7
    %v351 = vsub.s32 0, %v350
    %v352 = vrot.slane %v348, %v351
    %353 = vmatprep.subr.mxu0 0.0
    %354 = vmatpush1.msra.mxu0 %v332
    %355 = vmatprep.subr.mxu0 0.0
    %356 = vmatpush1.msra.mxu0 %v333
    %357 = vmatprep.subr.mxu0 0.0
    %358 = vmatpush1.msra.mxu0 %v334
    %359 = vmatprep.subr.mxu0 0.0
    %360 = vmatpush1.msra.mxu0 %v335
    %361 = vmatprep.subr.mxu0 0.0
    %362 = vmatpush1.msra.mxu0 %v336
    %363 = vmatprep.subr.mxu0 0.0
    %364 = vmatpush1.msra.mxu0 %v337
    %365 = vmatprep.subr.mxu0 0.0
    %366 = vmatpush1.msra.mxu0 %v338
    %367 = vmatprep.subr.mxu0 0.0
    %368 = vmatpush1.msra.mxu0 %v339
    %369 = vmatprep.subr.mxu0 0.0
    %370 = vmatpush1.msra.mxu0 %v340
    %371 = vmatprep.subr.mxu0 0.0
    %372 = vmatpush1.msra.mxu0 %v341
    %373 = vmatprep.subr.mxu0 0.0
    %374 = vmatpush1.msra.mxu0 %v342
    %375 = vmatprep.subr.mxu0 0.0
    %376 = vmatpush1.msra.mxu0 %v343
    %377 = vmatprep.subr.mxu0 0.0
    %378 = vmatpush1.msra.mxu0 %v344
    %379 = vmatprep.subr.mxu0 0.0
    %380 = vmatpush1.msra.mxu0 %v345
    %381 = vmatprep.subr.mxu0 0.0
    %382 = vmatpush1.msra.mxu0 %v346
    %383 = vmatprep.subr.mxu0 0.0
    %384 = vmatpush1.msra.mxu0 %v347
    %385 = vmatprep.subr.mxu0 0.0
    %386 = vmatpush1.msra.mxu0 0.0
    %387 = vmatprep.subr.mxu0 0.0
    %388 = vmatpush1.msra.mxu0 0.0
    %389 = vmatprep.subr.mxu0 0.0
    %390 = vmatpush1.msra.mxu0 0.0
    %391 = vmatprep.subr.mxu0 0.0
    %392 = vmatpush1.msra.mxu0 0.0
    %393 = vmatprep.subr.mxu0 0.0
    %394 = vmatpush1.msra.mxu0 0.0
    %395 = vmatprep.subr.mxu0 0.0
    %396 = vmatpush1.msra.mxu0 0.0
    %397 = vmatprep.subr.mxu0 0.0
    %398 = vmatpush1.msra.mxu0 0.0
    %399 = vmatprep.subr.mxu0 0.0
    %400 = vmatpush1.msra.mxu0 0.0
    %401 = vmatprep.subr.mxu0 0.0
    %402 = vmatpush1.msra.mxu0 0.0
    %403 = vmatprep.subr.mxu0 0.0
    %404 = vmatpush1.msra.mxu0 0.0
    %405 = vmatprep.subr.mxu0 0.0
    %406 = vmatpush1.msra.mxu0 0.0
    %407 = vmatprep.subr.mxu0 0.0
    %408 = vmatpush1.msra.mxu0 0.0
    %409 = vmatprep.subr.mxu0 0.0
    %410 = vmatpush1.msra.mxu0 0.0
    %411 = vmatprep.subr.mxu0 0.0
    %412 = vmatpush1.msra.mxu0 0.0
    %413 = vmatprep.subr.mxu0 0.0
    %414 = vmatpush1.msra.mxu0 0.0
    %415 = vmatprep.subr.mxu0 0.0
    %416 = vmatpush1.msra.mxu0 0.0
    %417 = vmatprep.mubr.f32.mxu0 0.0
    %418 = vmatmul.mubr.f32.gmra.mrb[0].mxu0 %v330
    %v419 = vpop.f32.mrb[0].mxu0
    %v420 = vadd.f32 %v352, %v419
    %v421 = vpop.f32.mrb[0].mxu0
    %422 = vdwg.mxu0
    %v423 = vmax.f32 %v420, 0.0
    %s424 = scalar_lea.vmem [#allocation5], 512
    %v425 = vld [vmem:[%s424] sm:$0xff]
    %v426 = vld [vmem:[%s424 + $0x8] sm:$0xff]
    %v427 = vld [vmem:[%s424 + $0x10] sm:$0xff]
    %v428 = vld [vmem:[%s424 + $0x18] sm:$0xff]
    %v429 = vld [vmem:[%s424 + $0x20] sm:$0xff]
    %v430 = vld [vmem:[%s424 + $0x28] sm:$0xff]
    %v431 = vld [vmem:[%s424 + $0x30] sm:$0xff]
    %v432 = vld [vmem:[%s424 + $0x38] sm:$0xff]
    %v433 = vld [vmem:[%s424 + $0x40] sm:$0xff]
    %v434 = vld [vmem:[%s424 + $0x48] sm:$0xff]
    %v435 = vld [vmem:[%s424 + $0x50] sm:$0xff]
    %v436 = vld [vmem:[%s424 + $0x58] sm:$0xff]
    %v437 = vld [vmem:[%s424 + $0x60] sm:$0xff]
    %v438 = vld [vmem:[%s424 + $0x68] sm:$0xff]
    %v439 = vld [vmem:[%s424 + $0x70] sm:$0xff]
    %v440 = vld [vmem:[%s424 + $0x78] sm:$0xff]
    %v441 = vld [vmem:[#allocation7 + $0x4] sm:$0x1]
    %v442 = vlaneseq
    %v443 = vshrl.u32 %v442, 7
    %v444 = vsub.s32 0, %v443
    %v445 = vrot.slane %v441, %v444
    %446 = vmatprep.subr.mxu0 0.0
    %447 = vmatpush1.msra.mxu0 %v425
    %448 = vmatprep.subr.mxu0 0.0
    %449 = vmatpush1.msra.mxu0 %v426
    %450 = vmatprep.subr.mxu0 0.0
    %451 = vmatpush1.msra.mxu0 %v427
    %452 = vmatprep.subr.mxu0 0.0
    %453 = vmatpush1.msra.mxu0 %v428
    %454 = vmatprep.subr.mxu0 0.0
    %455 = vmatpush1.msra.mxu0 %v429
    %456 = vmatprep.subr.mxu0 0.0
    %457 = vmatpush1.msra.mxu0 %v430
    %458 = vmatprep.subr.mxu0 0.0
    %459 = vmatpush1.msra.mxu0 %v431
    %460 = vmatprep.subr.mxu0 0.0
    %461 = vmatpush1.msra.mxu0 %v432
    %462 = vmatprep.subr.mxu0 0.0
    %463 = vmatpush1.msra.mxu0 %v433
    %464 = vmatprep.subr.mxu0 0.0
    %465 = vmatpush1.msra.mxu0 %v434
    %466 = vmatprep.subr.mxu0 0.0
    %467 = vmatpush1.msra.mxu0 %v435
    %468 = vmatprep.subr.mxu0 0.0
    %469 = vmatpush1.msra.mxu0 %v436
    %470 = vmatprep.subr.mxu0 0.0
    %471 = vmatpush1.msra.mxu0 %v437
    %472 = vmatprep.subr.mxu0 0.0
    %473 = vmatpush1.msra.mxu0 %v438
    %474 = vmatprep.subr.mxu0 0.0
    %475 = vmatpush1.msra.mxu0 %v439
    %476 = vmatprep.subr.mxu0 0.0
    %477 = vmatpush1.msra.mxu0 %v440
    %478 = vmatprep.subr.mxu0 0.0
    %479 = vmatpush1.msra.mxu0 0.0
    %480 = vmatprep.subr.mxu0 0.0
    %481 = vmatpush1.msra.mxu0 0.0
    %482 = vmatprep.subr.mxu0 0.0
    %483 = vmatpush1.msra.mxu0 0.0
    %484 = vmatprep.subr.mxu0 0.0
    %485 = vmatpush1.msra.mxu0 0.0
    %486 = vmatprep.subr.mxu0 0.0
    %487 = vmatpush1.msra.mxu0 0.0
    %488 = vmatprep.subr.mxu0 0.0
    %489 = vmatpush1.msra.mxu0 0.0
    %490 = vmatprep.subr.mxu0 0.0
    %491 = vmatpush1.msra.mxu0 0.0
    %492 = vmatprep.subr.mxu0 0.0
    %493 = vmatpush1.msra.mxu0 0.0
    %494 = vmatprep.subr.mxu0 0.0
    %495 = vmatpush1.msra.mxu0 0.0
    %496 = vmatprep.subr.mxu0 0.0
    %497 = vmatpush1.msra.mxu0 0.0
    %498 = vmatprep.subr.mxu0 0.0
    %499 = vmatpush1.msra.mxu0 0.0
    %500 = vmatprep.subr.mxu0 0.0
    %501 = vmatpush1.msra.mxu0 0.0
    %502 = vmatprep.subr.mxu0 0.0
    %503 = vmatpush1.msra.mxu0 0.0
    %504 = vmatprep.subr.mxu0 0.0
    %505 = vmatpush1.msra.mxu0 0.0
    %506 = vmatprep.subr.mxu0 0.0
    %507 = vmatpush1.msra.mxu0 0.0
    %508 = vmatprep.subr.mxu0 0.0
    %509 = vmatpush1.msra.mxu0 0.0
    %510 = vmatprep.mubr.f32.mxu0 0.0
    %511 = vmatmul.mubr.f32.gmra.mrb[0].mxu0 %v423
    %v512 = vpop.f32.mrb[0].mxu0
    %v513 = vadd.f32 %v445, %v512
    %v514 = vpop.f32.mrb[0].mxu0
    %515 = vdwg.mxu0
    %516 = vst [vmem:[#allocation8] sm:$0xff] %v513
    // Predicated region
    $region26: #{tpu_custom_call.1} parent=1 // pred_check
      _
    $region27: #{tpu_custom_call.1} parent=1 // pred_check_branch
      %518 = sbr.rel (0) target = $region29
    $region28: #{tpu_custom_call.1} parent=1 // pred_region
      %s520 = ssub.s32 128, 128
      %521 = vsyncadd [#allocation4], %s520
      %s523 = sshll.u32 [#allocation8], 4
      %s524 = int_to_ptr.vmem [resolvable:$true] %s523
      %526 = dma.vmem_to_hbm [thread:$0]  %s524, 128, %s3, [#allocation4]
    $region29: #{tpu_custom_call.1} parent=1 // pred_fallthru
      _
    // Predicated region
    $region30: #{tpu_custom_call.1} parent=1 // pred_check
      _
    $region31: #{tpu_custom_call.1} parent=1 // pred_check_branch
      %528 = sbr.rel (0) target = $region33
    $region32: #{tpu_custom_call.1} parent=1 // pred_region
      %529 = dma.done [#allocation4], 128
    $region33: #{tpu_custom_call.1} parent=1 // pred_fallthru
      _
    %530 = vsyncpa [#allocation3], 1
    %531 = vsyncpa [#allocation6], 1
    %532 = vsyncpa [#allocation4], 1

</llo_original>
